<compile_context>
chip_gen: v7x
topology: tpu7x:2x2x1
jax: 0.10.0
libtpu: 0.0.40
codegen_flags: <defaults>
</compile_context>

<pallas_src>
import functools
import math

import numpy as np

import jax
import jax.numpy as jnp
from jax.experimental import pallas as pl
from jax.experimental.pallas import tpu as pltpu


_N_MELS = 13                        # module hard-codes melkwargs n_mels=13
_MEL_PAD = 128                      # mel axis padded to one lane tile
_OUT_LANES = 128                    # lane-dense MFCC output width (cols n_mfcc..127 are zero)
_T_MFCC_DEFAULT_SR = 16000          # T.MFCC default sample_rate (module does not override it)
_STREAM_W2_BYTES = 4 * 1024 * 1024  # stream W2 over a Q grid above this size


def _round_up(x, m):
    return ((x + m - 1) // m) * m


# ----------------------------------------------------------------------------
# Pallas kernels
# ----------------------------------------------------------------------------

def _mfcc_single_kernel(frames_ref, w2_ref, fb_ref, dct_ref, out_ref):
    # Single-step path (small configs): everything VMEM resident, one fused-K matmul.
    #   frames : (NF, K)    bf16   framed waveform, K = q_tot * hop_in
    #   w2     : (K, 2F)    bf16   fused resample+Hann+DFT weight, [cos | sin] lane halves
    #   fb     : (F, 128)   f32    zero-padded HTK mel filterbank
    #   dct    : (128, 128) f32    zero-padded orthonormal DCT-II (lane-dense output)
    #   out    : (NF, 128)  f32
    f_pad = w2_ref.shape[1] // 2
    reim = jnp.dot(frames_ref[...], w2_ref[...], preferred_element_type=jnp.float32)
    re = reim[:, :f_pad]                        # 128-aligned static split
    im = reim[:, f_pad:]
    power = re * re + im * im                   # |STFT|^2 (+sin convention fine: power only)
    mel = jnp.dot(power, fb_ref[...], preferred_element_type=jnp.float32)
    logmel = jnp.log(mel + 1e-6)                # MFCC(log_mels=True)
    out_ref[...] = jnp.dot(logmel, dct_ref[...], preferred_element_type=jnp.float32)


def _mfcc_stream_kernel(pm_ref, w2_ref, fb_ref, dct_ref, out_ref, acc_ref):
    # Streamed path (large W2): grid=(q_tot,) "arbitrary"; W2 chunk DMA overlaps the MXU,
    # reim accumulated into a VMEM scratch, epilogue on the last step.
    #   pm  : (NF, hop_in)  bf16   q-th shifted frame slab (leading dim squeezed by BlockSpec)
    #   w2  : (hop_in, 2F)  bf16   q-th fused weight chunk (leading dim squeezed)
    #   acc : (NF, 2F)      f32    VMEM scratch accumulator
    q = pl.program_id(0)

    @pl.when(q == 0)
    def _():
        acc_ref[...] = jnp.zeros_like(acc_ref)

    acc_ref[...] += jnp.dot(pm_ref[...], w2_ref[...],
                            preferred_element_type=jnp.float32)

    @pl.when(q == pl.num_programs(0) - 1)
    def _():
        f_pad = acc_ref.shape[1] // 2
        reim = acc_ref[...]
        re = reim[:, :f_pad]
        im = reim[:, f_pad:]
        power = re * re + im * im
        mel = jnp.dot(power, fb_ref[...], preferred_element_type=jnp.float32)
        logmel = jnp.log(mel + 1e-6)
        out_ref[...] = jnp.dot(logmel, dct_ref[...],
                               preferred_element_type=jnp.float32)


# ----------------------------------------------------------------------------
# Analytic transform constants (deterministic, no checkpoint), built in numpy.
# ----------------------------------------------------------------------------

def _sinc_kernel_np(orig_g, new_g, lowpass_filter_width=6, rolloff=0.99):
    # torchaudio.functional._get_sinc_resample_kernel (sinc_interp_hann)
    base_freq = min(orig_g, new_g) * rolloff
    width = int(math.ceil(lowpass_filter_width * orig_g / base_freq))
    idx = np.arange(-width, width + orig_g, dtype=np.float64) / orig_g
    t = np.arange(0, -new_g, -1, dtype=np.float64)[:, None] / new_g + idx[None, :]
    t = t * base_freq
    t = np.clip(t, -lowpass_filter_width, lowpass_filter_width)
    window = np.cos(t * np.pi / lowpass_filter_width / 2.0) ** 2
    t = t * np.pi
    scale = base_freq / orig_g
    safe_t = np.where(t == 0.0, 1.0, t)
    kern = np.where(t == 0.0, 1.0, np.sin(safe_t) / safe_t) * window * scale
    return kern, width                                     # (new_g, 2*width+orig_g)


def _mel_fbank_np(n_freqs, sample_rate, n_mels):
    # torchaudio melscale_fbanks: mel_scale='htk', norm=None, f_min=0, f_max=sr/2
    def hz_to_mel(f):
        return 2595.0 * np.log10(1.0 + np.asarray(f, np.float64) / 700.0)

    def mel_to_hz(m):
        return 700.0 * (10.0 ** (m / 2595.0) - 1.0)

    all_freqs = np.linspace(0.0, sample_rate / 2.0, n_freqs)
    m_pts = np.linspace(hz_to_mel(0.0), hz_to_mel(sample_rate / 2.0), n_mels + 2)
    f_pts = mel_to_hz(m_pts)
    f_diff = f_pts[1:] - f_pts[:-1]
    slopes = f_pts[None, :] - all_freqs[:, None]
    down = -slopes[:, :-2] / f_diff[:-1]
    up = slopes[:, 2:] / f_diff[1:]
    return np.maximum(0.0, np.minimum(down, up))           # (n_freqs, n_mels)


def _dct_np(n_mfcc, n_mels):
    # torchaudio.functional.create_dct(norm='ortho') -> (n_mels, n_mfcc)
    n = np.arange(n_mels, dtype=np.float64)
    k = np.arange(n_mfcc, dtype=np.float64)[:, None]
    dct = np.cos(np.pi / n_mels * (n + 0.5) * k)
    dct[0] *= 1.0 / math.sqrt(2.0)
    dct *= math.sqrt(2.0 / n_mels)
    return dct.T


def _build_constants(sr, rf, n_fft, hop, n_mels, n_mfcc):
    g = math.gcd(int(sr), int(rf))
    orig_g, new_g = int(sr) // g, int(rf) // g
    if orig_g == new_g:                                    # sr == rf: identity resample
        kern, width = np.ones((1, 1), np.float64), 0
    else:
        kern, width = _sinc_kernel_np(orig_g, new_g)
    kw = kern.shape[1]

    # TODO(synk): phase-dependent fusion (hop or n_fft not divisible by the upsampling
    # factor) would need one weight per phase class; not implemented.
    assert hop % new_g == 0 and n_fft % new_g == 0, "unsupported resample phase pattern"

    hop_in = (hop // new_g) * orig_g                       # MFCC hop in *input* samples
    m_tot = n_fft // new_g                                 # resample conv steps per fft frame
    u_tot = orig_g * (m_tot - 1) + kw                      # input samples touched per fft frame
    q_tot = -(-u_tot // hop_in)                            # ceil
    u_pad = q_tot * hop_in

    n_freqs = n_fft // 2 + 1
    f_pad = _round_up(n_freqs, 128)

    # Hann-windowed DFT matrices (periodic Hann, rfft bins).
    n = np.arange(n_fft, dtype=np.float64)
    win = 0.5 - 0.5 * np.cos(2.0 * np.pi * n / n_fft)
    freq = np.arange(n_freqs, dtype=np.float64)
    ang = 2.0 * np.pi * np.outer(n, freq) / n_fft
    wcos = win[:, None] * np.cos(ang)                      # (n_fft, n_freqs)
    wsin = win[:, None] * np.sin(ang)

    # Resample-into-frame matrix R: frame sample n=new_g*m+p comes from input offsets
    # orig_g*m + j with weight kern[p, j].
    r_mat = np.zeros((u_pad, n_fft), np.float64)
    for m in range(m_tot):
        for p in range(new_g):
            r_mat[orig_g * m: orig_g * m + kw, new_g * m + p] = kern[p]

    w2 = np.zeros((u_pad, 2 * f_pad), np.float64)
    w2[:, :n_freqs] = r_mat @ wcos                         # cos block, lanes [0, f_pad)
    w2[:, f_pad:f_pad + n_freqs] = r_mat @ wsin            # sin block, lanes [f_pad, 2*f_pad)
    w2 = w2.reshape(q_tot, hop_in, 2 * f_pad)

    # Mel filterbank built with the T.MFCC *default* sample_rate (16000): the original
    # module never passes sample_rate to T.MFCC, so this matches its semantics exactly.
    fb = np.zeros((f_pad, _MEL_PAD), np.float64)
    fb[:n_freqs, :n_mels] = _mel_fbank_np(n_freqs, _T_MFCC_DEFAULT_SR, n_mels)
    dct = np.zeros((_MEL_PAD, _OUT_LANES), np.float64)     # lane-dense: cols n_mfcc..127 zero
    dct[:n_mels, :n_mfcc] = _dct_np(n_mfcc, n_mels)

    return dict(width=width, hop_in=hop_in, q_tot=q_tot, f_pad=f_pad,
                w2=w2.astype(np.float32), fb=fb.astype(np.float32),
                dct=dct.astype(np.float32))


@functools.lru_cache(maxsize=16)
def _get_plan(sr, rf, segment_len, n_mfcc):
    """Per-config constants, built once and kept device-resident (bf16 W2, f32 fb/DCT)."""
    assert n_mfcc <= _OUT_LANES and _N_MELS <= _MEL_PAD
    n_fft = int(0.16 * rf)
    hop = int(0.03 * rf)
    c = _build_constants(sr, rf, n_fft, hop, _N_MELS, n_mfcc)
    n_frames = 1 + (segment_len - n_fft) // hop
    nf_pad = _round_up(max(n_frames, 8), 8)
    a_pad = _round_up(nf_pad + c["q_tot"] - 1, 8)
    w2 = jnp.asarray(c["w2"], dtype=jnp.bfloat16)          # (Q, hop_in, 2*f_pad)
    fb = jnp.asarray(c["fb"], dtype=jnp.float32)           # (f_pad, 128)
    dct = jnp.asarray(c["dct"], dtype=jnp.float32)         # (128, 128)
    return dict(hop_in=c["hop_in"], q_tot=c["q_tot"], width=c["width"], f_pad=c["f_pad"],
                n_frames=n_frames, nf_pad=nf_pad, a_pad=a_pad, n_mfcc=n_mfcc,
                w2=w2, fb=fb, dct=dct, w2_bytes=int(w2.size) * 2)


@functools.lru_cache(maxsize=1)
def _vmem_capacity_bytes():
    try:
        return int(pltpu.get_tpu_info().vmem_capacity_bytes)
    except Exception:
        return 64 * 1024 * 1024                            # conservative (v7x per-TC VMEM)


def _pick_vmem_limit(plan, stream):
    budget = int(_vmem_capacity_bytes() * 0.8)             # generation-aware cap with headroom
    hop_in, q_tot = plan["hop_in"], plan["q_tot"]
    f_pad, nf_pad = plan["f_pad"], plan["nf_pad"]
    two_f = 2 * f_pad
    fixed = (f_pad * _MEL_PAD * 4 + _MEL_PAD * _OUT_LANES * 4
             + nf_pad * _OUT_LANES * 4 + nf_pad * two_f * 4)
    if stream:
        per_step = (hop_in * two_f + nf_pad * hop_in) * 2  # bf16 W2 chunk + LHS slab
        want = fixed + 3 * per_step                        # double-buffered + headroom
    else:
        want = fixed + (q_tot * hop_in * two_f + nf_pad * q_tot * hop_in) * 2
    want += 8 * 1024 * 1024                                # Mosaic internals headroom
    return min(budget, max(want, 16 * 1024 * 1024))


# ----------------------------------------------------------------------------
# jitted device-side forward
# ----------------------------------------------------------------------------

@functools.partial(jax.jit, static_argnames=(
    "hop_in", "q_tot", "width", "a_pad", "nf_pad", "n_frames",
    "n_mfcc", "f_pad", "stream", "vmem_limit"))
def _forward_jit(waveform, w2, fb, dct, *, hop_in, q_tot, width, a_pad, nf_pad,
                 n_frames, n_mfcc, f_pad, stream, vmem_limit):
    need = a_pad * hop_in
    L = int(waveform.shape[1])
    take = max(0, min(L, need - width))

    # Channel mean (linear resample commutes with it) and crop of the *input* to the prefix
    # actually needed for segment_len resampled samples.
    # TODO(synk): if the resampled signal is shorter than segment_len, the last ~kw samples
    # near the boundary are sinc-extrapolated from zero padding instead of exact zeros.
    wave = jnp.mean(waveform[:, :take].astype(jnp.float32), axis=0)
    padded = jnp.pad(wave, (width, need - width - take))
    # Pre-cast to bf16 once (MXU LHS dtype) - no per-q VPU casts inside the kernel.
    pm_base = padded.reshape(a_pad, hop_in).astype(jnp.bfloat16)

    two_f = 2 * f_pad
    flops = (2 * nf_pad * (q_tot * hop_in) * two_f         # fused resample+DFT matmuls
             + 3 * nf_pad * f_pad                          # power spectrum
             + 2 * nf_pad * f_pad * _MEL_PAD               # mel
             + 2 * nf_pad * _MEL_PAD * _OUT_LANES)         # DCT
    bytes_accessed = (q_tot * nf_pad * hop_in * 2 + w2.size * 2
                      + fb.size * 4 + dct.size * 4 + nf_pad * _OUT_LANES * 4)
    cost = pl.CostEstimate(flops=int(flops), transcendentals=int(nf_pad * _MEL_PAD),
                           bytes_accessed=int(bytes_accessed))

    if not stream:
        # Small-config path: one fused-K matmul (K = q_tot*hop_in), everything resident.
        k_tot = q_tot * hop_in
        frames = jnp.concatenate([pm_base[q:q + nf_pad] for q in range(q_tot)], axis=1)
        w2_flat = w2.reshape(k_tot, two_f)
        mfcc = pl.pallas_call(
            _mfcc_single_kernel,
            out_shape=jax.ShapeDtypeStruct((nf_pad, _OUT_LANES), jnp.float32),
            in_specs=[pl.BlockSpec(memory_space=pltpu.MemorySpace.VMEM)] * 4,
            out_specs=pl.BlockSpec(memory_space=pltpu.MemorySpace.VMEM),
            compiler_params=pltpu.CompilerParams(vmem_limit_bytes=int(vmem_limit)),
            cost_estimate=cost,
        )(frames, w2_flat, fb, dct)
    else:
        # Large-config path: stream W2 (and the matching LHS slab) over a Q reduction grid.
        stacked = jnp.stack([pm_base[q:q + nf_pad] for q in range(q_tot)], axis=0)
        mfcc = pl.pallas_call(
            _mfcc_stream_kernel,
            out_shape=jax.ShapeDtypeStruct((nf_pad, _OUT_LANES), jnp.float32),
            grid_spec=pltpu.PrefetchScalarGridSpec(
                num_scalar_prefetch=0,
                grid=(q_tot,),
                in_specs=[
                    pl.BlockSpec((None, nf_pad, hop_in), lambda q: (q, 0, 0)),
                    pl.BlockSpec((None, hop_in, two_f), lambda q: (q, 0, 0)),
                    pl.BlockSpec((f_pad, _MEL_PAD), lambda q: (0, 0)),
                    pl.BlockSpec((_MEL_PAD, _OUT_LANES), lambda q: (0, 0)),
                ],
                out_specs=pl.BlockSpec((nf_pad, _OUT_LANES), lambda q: (0, 0)),
                scratch_shapes=[pltpu.VMEM((nf_pad, two_f), jnp.float32)],
            ),
            compiler_params=pltpu.CompilerParams(
                dimension_semantics=("arbitrary",),        # Q is a reduction axis
                vmem_limit_bytes=int(vmem_limit)),
            cost_estimate=cost,
        )(stacked, w2, fb, dct)

    mfcc = mfcc[:n_frames, :n_mfcc]                        # drop frame / lane padding
    return jnp.transpose(mfcc)[None, :, :]                 # (1, n_mfcc, n_frames)


# ----------------------------------------------------------------------------
# Public forward pass
# ----------------------------------------------------------------------------

def audio_transform_forward(waveform, sampling_rate,
                            resample_freq=800, segment_len=1600, n_mfcc=13,
                            force_stream=None):
    plan = _get_plan(int(sampling_rate), int(resample_freq), int(segment_len), int(n_mfcc))
    stream = (plan["w2_bytes"] > _STREAM_W2_BYTES) if force_stream is None else bool(force_stream)
    vmem_limit = _pick_vmem_limit(plan, stream)
    return _forward_jit(
        waveform, plan["w2"], plan["fb"], plan["dct"],
        hop_in=plan["hop_in"], q_tot=plan["q_tot"], width=plan["width"],
        a_pad=plan["a_pad"], nf_pad=plan["nf_pad"], n_frames=plan["n_frames"],
        n_mfcc=plan["n_mfcc"], f_pad=plan["f_pad"], stream=stream, vmem_limit=vmem_limit)


# ----------------------------------------------------------------------------
# Independent float64 numpy reference (resample -> mean -> pad/crop -> MFCC)
# ----------------------------------------------------------------------------

def _reference_mfcc_np(waveform, sr, rf, segment_len, n_mfcc):
    n_fft = int(0.16 * rf)
    hop = int(0.03 * rf)
    n_mels = _N_MELS
    g = math.gcd(sr, rf)
    orig_g, new_g = sr // g, rf // g
    wave = np.asarray(waveform, np.float64)

    if orig_g != new_g:
        kern, width = _sinc_kernel_np(orig_g, new_g)
        kw = kern.shape[1]
        L = wave.shape[1]
        padded = np.pad(wave, ((0, 0), (width, width + orig_g)))
        n_out = (padded.shape[1] - kw) // orig_g + 1
        idx = np.arange(n_out)[:, None] * orig_g + np.arange(kw)[None, :]
        frames = padded[:, idx]
        res = np.einsum('cok,pk->cop', frames, kern).reshape(wave.shape[0], -1)
        res = res[:, : int(math.ceil(new_g * L / orig_g))]
    else:
        res = wave

    res = res.mean(axis=0, keepdims=True)
    if res.shape[1] < segment_len:
        res = np.pad(res, ((0, 0), (0, segment_len - res.shape[1])))
    else:
        res = res[:, :segment_len]                         # crop start 0 (deterministic)

    n_frames = 1 + (segment_len - n_fft) // hop
    fidx = np.arange(n_frames)[:, None] * hop + np.arange(n_fft)[None, :]
    fr = res[0][fidx]
    n = np.arange(n_fft)
    win = 0.5 - 0.5 * np.cos(2.0 * np.pi * n / n_fft)
    spec = np.fft.rfft(fr * win[None, :], axis=1)
    power = np.abs(spec) ** 2
    mel = power @ _mel_fbank_np(n_fft // 2 + 1, _T_MFCC_DEFAULT_SR, n_mels)
    mfcc = np.log(mel + 1e-6) @ _dct_np(n_mfcc, n_mels)
    return mfcc.T[None]


if __name__ == "__main__":
    key = jax.random.PRNGKey(0)
    # Small example consistent with the module: stereo waveform at 1200 Hz,
    # resampled to 800 Hz, segment_len = 2 * 800 = 1600 samples.
    sampling_rate = 1200
    waveform = jax.random.normal(key, (2, 2400), dtype=jnp.float32)

    # Path A (auto-selected): small-config single-step fused-K kernel.
    feats = audio_transform_forward(waveform, sampling_rate,
                                    resample_freq=800, segment_len=1600, n_mfcc=13)
    feats = jax.block_until_ready(feats)

    # Path B: force the Q-streaming accumulator kernel on the same config to exercise it.
    feats_stream = audio_transform_forward(waveform, sampling_rate,
                                           resample_freq=800, segment_len=1600, n_mfcc=13,
                                           force_stream=True)
    feats_stream = jax.block_until_ready(feats_stream)

    n_fft = int(0.16 * 800)
    hop = int(0.03 * 800)
    expected_frames = 1 + (1600 - n_fft) // hop
    assert feats.shape == (1, 13, expected_frames), feats.shape
    assert feats_stream.shape == feats.shape, feats_stream.shape
    assert feats.dtype == jnp.float32
    assert bool(jnp.all(jnp.isfinite(feats)))
    assert bool(jnp.all(jnp.isfinite(feats_stream)))

    ref = _reference_mfcc_np(np.asarray(waveform), 1200, 800, 1600, 13)
    err_a = float(np.max(np.abs(np.asarray(feats, dtype=np.float64) - ref)))
    err_b = float(np.max(np.abs(np.asarray(feats_stream, dtype=np.float64) - ref)))
    assert err_a < 0.5, f"single-step kernel max abs error vs float64 reference: {err_a}"
    assert err_b < 0.5, f"streamed kernel max abs error vs float64 reference: {err_b}"
    print("KERNEL_OK")
</pallas_src>

<mosaic_0001>
module attributes {stable_mosaic.version = 11 : i64} {
  func.func @_mfcc_single_kernel(%arg0: memref<64x216xbf16, #tpu.memory_space<vmem>>, %arg1: memref<216x256xbf16, #tpu.memory_space<vmem>>, %arg2: memref<128x128xf32, #tpu.memory_space<vmem>>, %arg3: memref<128x128xf32, #tpu.memory_space<vmem>>, %arg4: memref<64x128xf32, #tpu.memory_space<vmem>>) attributes {dimension_semantics = [], scalar_prefetch = 0 : i64, scratch_operands = 0 : i64, tpu.core_type = #tpu.core_type<tc>} {
    %c0 = arith.constant 0 : index
    %c0_0 = arith.constant 0 : index
    %0 = vector.load %arg0[%c0, %c0_0] : memref<64x216xbf16, #tpu.memory_space<vmem>>, vector<64x216xbf16>
    %c0_1 = arith.constant 0 : index
    %c0_2 = arith.constant 0 : index
    %1 = vector.load %arg1[%c0_1, %c0_2] : memref<216x256xbf16, #tpu.memory_space<vmem>>, vector<216x256xbf16>
    %cst = arith.constant dense<0.000000e+00> : vector<64x256xf32>
    %2 = tpu.matmul %0, %1, %cst {dimension_numbers = #tpu.dot_dimension_numbers<[1], [0], [0], [1], [0, 0, 1, 1], [], []>} : vector<64x216xbf16>, vector<216x256xbf16>, vector<64x256xf32> -> vector<64x256xf32>
    %3 = vector.extract_strided_slice %2 {offsets = [0, 0], sizes = [64, 128], strides = [1, 1]} : vector<64x256xf32> to vector<64x128xf32>
    %4 = vector.extract_strided_slice %2 {offsets = [0, 128], sizes = [64, 128], strides = [1, 1]} : vector<64x256xf32> to vector<64x128xf32>
    %5 = arith.mulf %3, %3 : vector<64x128xf32>
    %6 = arith.mulf %4, %4 : vector<64x128xf32>
    %7 = arith.addf %5, %6 : vector<64x128xf32>
    %c0_3 = arith.constant 0 : index
    %c0_4 = arith.constant 0 : index
    %8 = vector.load %arg2[%c0_3, %c0_4] : memref<128x128xf32, #tpu.memory_space<vmem>>, vector<128x128xf32>
    %cst_5 = arith.constant dense<0.000000e+00> : vector<64x128xf32>
    %9 = tpu.matmul %7, %8, %cst_5 {dimension_numbers = #tpu.dot_dimension_numbers<[1], [0], [0], [1], [0, 0, 1, 1], [], []>} : vector<64x128xf32>, vector<128x128xf32>, vector<64x128xf32> -> vector<64x128xf32>
    %cst_6 = arith.constant 9.99999997E-7 : f32
    %10 = vector.broadcast %cst_6 : f32 to vector<64x128xf32>
    %11 = arith.addf %9, %10 : vector<64x128xf32>
    %12 = math.log %11 : vector<64x128xf32>
    %c0_7 = arith.constant 0 : index
    %c0_8 = arith.constant 0 : index
    %13 = vector.load %arg3[%c0_7, %c0_8] : memref<128x128xf32, #tpu.memory_space<vmem>>, vector<128x128xf32>
    %cst_9 = arith.constant dense<0.000000e+00> : vector<64x128xf32>
    %14 = tpu.matmul %12, %13, %cst_9 {dimension_numbers = #tpu.dot_dimension_numbers<[1], [0], [0], [1], [0, 0, 1, 1], [], []>} : vector<64x128xf32>, vector<128x128xf32>, vector<64x128xf32> -> vector<64x128xf32>
    %c0_10 = arith.constant 0 : index
    %c0_11 = arith.constant 0 : index
    %15 = vector.load %arg4[%c0_10, %c0_11] : memref<64x128xf32, #tpu.memory_space<vmem>>, vector<64x128xf32>
    tpu.vector_store %arg4[%c0_10, %c0_11], %14 {strides = array<i32>} : memref<64x128xf32, #tpu.memory_space<vmem>>, vector<64x128xf32>,
    return
  }
}

</mosaic_0001>

<llo_original>
// kernel: _forward_jit.1
$region0: #{_forward_jit.1}
  #allocation0 [shape = 'u32[]', space=smem, size = 0x4, offset = 0x4, fixed_abs, tag = 'smem constant byte address 0x4 - core index']
  #allocation1 [shape = 'u32[144,128]{1,0:T(1,128)}', space=vmem, size = 0x12000, scoped, tag = 'internal scratch']
  %s0 = inlined_call_operand.vmem [shape: bf16[64,216], index: 0, kind: input, shape index: {}]
  %s1 = inlined_call_operand.vmem [shape: bf16[216,256], index: 1, kind: input, shape index: {}]
  %s2 = inlined_call_operand.vmem [shape: f32[128,128], index: 2, kind: input, shape index: {}]
  %s3 = inlined_call_operand.vmem [shape: f32[128,128], index: 3, kind: input, shape index: {}]
  %s4 = inlined_call_operand.vmem [shape: f32[64,128], index: 4, kind: output, shape index: {}]
  %s5 = sld [smem:[#allocation0]]
  $region26: #{_forward_jit.1} parent=0
    _
  %s7 = ssub.s32 1, %s5
  %s8 = scalar_select 0, %s7, %s5
  // Predicated region
  $region2: #{_forward_jit.1} parent=0 // pred_check
    _
  $region3: #{_forward_jit.1} parent=0 // pred_check_branch
    %10 = sbr.rel (0) target = $region5
  $region4: #{_forward_jit.1} parent=0 // pred_region
    _
  $region5: #{_forward_jit.1} parent=0 // pred_fallthru
    _
  // Predicated region
  $region6: #{_forward_jit.1} parent=0 // pred_check
    _
  $region7: #{_forward_jit.1} parent=0 // pred_check_branch
    %12 = sbr.rel (0) target = $region9
  $region8: #{_forward_jit.1} parent=0 // pred_region
    _
  $region9: #{_forward_jit.1} parent=0 // pred_fallthru
    _
  // Predicated region
  $region10: #{_forward_jit.1} parent=0 // pred_check
    _
  $region11: #{_forward_jit.1} parent=0 // pred_check_branch
    %14 = sbr.rel (0) target = $region13
  $region12: #{_forward_jit.1} parent=0 // pred_region
    _
  $region13: #{_forward_jit.1} parent=0 // pred_fallthru
    _
  // Predicated region
  $region14: #{_forward_jit.1} parent=0 // pred_check
    _
  $region15: #{_forward_jit.1} parent=0 // pred_check_branch
    %16 = sbr.rel (0) target = $region17
  $region16: #{_forward_jit.1} parent=0 // pred_region
    _
  $region17: #{_forward_jit.1} parent=0 // pred_fallthru
    _
  %v18 = vld [vmem:[%s0] sm:$0xff]
  %v19 = vld [vmem:[%s0 + $0x8] sm:$0xff]
  %v20 = vld [vmem:[%s0 + $0x10] sm:$0xff]
  %v21 = vld [vmem:[%s0 + $0x18] sm:$0xff]
  %v22 = vld [vmem:[%s0 + $0x20] sm:$0xff]
  %v23 = vld [vmem:[%s0 + $0x28] sm:$0xff]
  %v24 = vld [vmem:[%s0 + $0x30] sm:$0xff]
  %v25 = vld [vmem:[%s0 + $0x38] sm:$0xff]
  %v26 = vld [vmem:[%s1] sm:$0xff]
  %v27 = vld [vmem:[%s1 + $0x8] sm:$0xff]
  %v28 = vld [vmem:[%s1 + $0x10] sm:$0xff]
  %v29 = vld [vmem:[%s1 + $0x18] sm:$0xff]
  %v30 = vld [vmem:[%s1 + $0x20] sm:$0xff]
  %v31 = vld [vmem:[%s1 + $0x28] sm:$0xff]
  %v32 = vld [vmem:[%s1 + $0x30] sm:$0xff]
  %v33 = vld [vmem:[%s1 + $0x38] sm:$0xff]
  %v34 = vld [vmem:[%s1 + $0x40] sm:$0xff]
  %v35 = vld [vmem:[%s1 + $0x48] sm:$0xff]
  %v36 = vld [vmem:[%s1 + $0x50] sm:$0xff]
  %v37 = vld [vmem:[%s1 + $0x58] sm:$0xff]
  %v38 = vld [vmem:[%s1 + $0x60] sm:$0xff]
  %v39 = vld [vmem:[%s1 + $0x68] sm:$0xff]
  %v40 = vld [vmem:[%s1 + $0x70] sm:$0xff]
  %v41 = vld [vmem:[%s1 + $0x78] sm:$0xff]
  %v42 = vld [vmem:[%s1 + $0x80] sm:$0xff]
  %v43 = vld [vmem:[%s1 + $0x88] sm:$0xff]
  %v44 = vld [vmem:[%s1 + $0x90] sm:$0xff]
  %v45 = vld [vmem:[%s1 + $0x98] sm:$0xff]
  %v46 = vld [vmem:[%s1 + $0xa0] sm:$0xff]
  %v47 = vld [vmem:[%s1 + $0xa8] sm:$0xff]
  %v48 = vld [vmem:[%s1 + $0xb0] sm:$0xff]
  %v49 = vld [vmem:[%s1 + $0xb8] sm:$0xff]
  %v50 = vld [vmem:[%s1 + $0xc0] sm:$0xff]
  %v51 = vld [vmem:[%s1 + $0xc8] sm:$0xff]
  %v52 = vld [vmem:[%s1 + $0xd0] sm:$0xff]
  %v61 = vunpack.c.l.b16 %v18
  %v62 = vunpack.c.h.b16 %v18
  %v63 = vunpack.c.l.b16 %v19
  %v64 = vunpack.c.h.b16 %v19
  %v65 = vunpack.c.l.b16 %v20
  %v66 = vunpack.c.h.b16 %v20
  %v67 = vunpack.c.l.b16 %v21
  %v68 = vunpack.c.h.b16 %v21
  %v69 = vunpack.c.l.b16 %v22
  %v70 = vunpack.c.h.b16 %v22
  %v71 = vunpack.c.l.b16 %v23
  %v72 = vunpack.c.h.b16 %v23
  %v73 = vunpack.c.l.b16 %v24
  %v74 = vunpack.c.h.b16 %v24
  %v75 = vunpack.c.l.b16 %v25
  %v76 = vunpack.c.h.b16 %v25
  %v77 = vpack.c.b16 %v63, %v61
  %v78 = vpack.c.b16 %v64, %v62
  %v79 = vpack.c.b16 %v67, %v65
  %v80 = vpack.c.b16 %v68, %v66
  %v81 = vpack.c.b16 %v71, %v69
  %v82 = vpack.c.b16 %v72, %v70
  %v83 = vpack.c.b16 %v75, %v73
  %v84 = vpack.c.b16 %v76, %v74
  %v116 = vunpack.c.l.b16 %v26
  %v117 = vunpack.c.h.b16 %v26
  %v118 = vunpack.c.l.b16 %v27
  %v119 = vunpack.c.h.b16 %v27
  %v120 = vunpack.c.l.b16 %v28
  %v121 = vunpack.c.h.b16 %v28
  %v122 = vunpack.c.l.b16 %v29
  %v123 = vunpack.c.h.b16 %v29
  %v124 = vunpack.c.l.b16 %v30
  %v125 = vunpack.c.h.b16 %v30
  %v126 = vunpack.c.l.b16 %v31
  %v127 = vunpack.c.h.b16 %v31
  %v128 = vunpack.c.l.b16 %v32
  %v129 = vunpack.c.h.b16 %v32
  %v130 = vunpack.c.l.b16 %v33
  %v131 = vunpack.c.h.b16 %v33
  %v132 = vunpack.c.l.b16 %v34
  %v133 = vunpack.c.h.b16 %v34
  %v134 = vunpack.c.l.b16 %v35
  %v135 = vunpack.c.h.b16 %v35
  %v136 = vunpack.c.l.b16 %v36
  %v137 = vunpack.c.h.b16 %v36
  %v138 = vunpack.c.l.b16 %v37
  %v139 = vunpack.c.h.b16 %v37
  %v140 = vunpack.c.l.b16 %v38
  %v141 = vunpack.c.h.b16 %v38
  %v142 = vunpack.c.l.b16 %v39
  %v143 = vunpack.c.h.b16 %v39
  %v144 = vunpack.c.l.b16 %v40
  %v145 = vunpack.c.h.b16 %v40
  %v146 = vunpack.c.l.b16 %v41
  %v147 = vunpack.c.h.b16 %v41
  %v148 = vunpack.c.l.b16 %v42
  %v149 = vunpack.c.h.b16 %v42
  %v150 = vunpack.c.l.b16 %v43
  %v151 = vunpack.c.h.b16 %v43
  %v152 = vunpack.c.l.b16 %v44
  %v153 = vunpack.c.h.b16 %v44
  %v154 = vunpack.c.l.b16 %v45
  %v155 = vunpack.c.h.b16 %v45
  %v156 = vunpack.c.l.b16 %v46
  %v157 = vunpack.c.h.b16 %v46
  %v158 = vunpack.c.l.b16 %v47
  %v159 = vunpack.c.h.b16 %v47
  %v160 = vunpack.c.l.b16 %v48
  %v161 = vunpack.c.h.b16 %v48
  %v162 = vunpack.c.l.b16 %v49
  %v163 = vunpack.c.h.b16 %v49
  %v164 = vunpack.c.l.b16 %v50
  %v165 = vunpack.c.h.b16 %v50
  %v166 = vunpack.c.l.b16 %v51
  %v167 = vunpack.c.h.b16 %v51
  %v168 = vunpack.c.l.b16 %v52
  %v169 = vunpack.c.h.b16 %v52
  %v170 = vpack.c.b16 %v118, %v116
  %v171 = vpack.c.b16 %v119, %v117
  %v172 = vpack.c.b16 %v122, %v120
  %v173 = vpack.c.b16 %v123, %v121
  %v174 = vpack.c.b16 %v126, %v124
  %v175 = vpack.c.b16 %v127, %v125
  %v176 = vpack.c.b16 %v130, %v128
  %v177 = vpack.c.b16 %v131, %v129
  %v178 = vpack.c.b16 %v134, %v132
  %v179 = vpack.c.b16 %v135, %v133
  %v180 = vpack.c.b16 %v138, %v136
  %v181 = vpack.c.b16 %v139, %v137
  %v182 = vpack.c.b16 %v142, %v140
  %v183 = vpack.c.b16 %v143, %v141
  %v184 = vpack.c.b16 %v146, %v144
  %v185 = vpack.c.b16 %v147, %v145
  %v186 = vpack.c.b16 %v150, %v148
  %v187 = vpack.c.b16 %v151, %v149
  %v188 = vpack.c.b16 %v154, %v152
  %v189 = vpack.c.b16 %v155, %v153
  %v190 = vpack.c.b16 %v158, %v156
  %v191 = vpack.c.b16 %v159, %v157
  %v192 = vpack.c.b16 %v162, %v160
  %v193 = vpack.c.b16 %v163, %v161
  %v194 = vpack.c.b16 %v166, %v164
  %v195 = vpack.c.b16 %v167, %v165
  %v196 = vpack.c.b16 %v168, %v168
  %v197 = vpack.c.b16 %v169, %v169
  %vm224 = vcmask 719872
  %v226 = vsel %vm224, %v78, 0
  %v229 = vsel %vm224, %v80, 0
  %v232 = vsel %vm224, %v82, 0
  %v235 = vsel %vm224, %v84, 0
  %vm237 = vcmask 1043456
  %v239 = vsel %vm237, %v196, 0
  %v242 = vsel %vm237, %v197, 0
  %244 = vmatprep.subr.bf16.mxu0 %v171
  %245 = vmatpush1.bf16.msra.mxu0 %v170
  %246 = vmatprep.subr.bf16.mxu0 %v173
  %247 = vmatpush1.bf16.msra.mxu0 %v172
  %248 = vmatprep.subr.bf16.mxu0 %v175
  %249 = vmatpush1.bf16.msra.mxu0 %v174
  %250 = vmatprep.subr.bf16.mxu0 %v177
  %251 = vmatpush1.bf16.msra.mxu0 %v176
  %252 = vmatprep.subr.bf16.mxu0 %v179
  %253 = vmatpush1.bf16.msra.mxu0 %v178
  %254 = vmatprep.subr.bf16.mxu0 %v181
  %255 = vmatpush1.bf16.msra.mxu0 %v180
  %256 = vmatprep.subr.bf16.mxu0 %v183
  %257 = vmatpush1.bf16.msra.mxu0 %v182
  %258 = vmatprep.subr.bf16.mxu0 %v185
  %259 = vmatpush1.bf16.msra.mxu0 %v184
  %260 = vmatprep.subr.bf16.mxu0 %v187
  %261 = vmatpush1.bf16.msra.mxu0 %v186
  %262 = vmatprep.subr.bf16.mxu0 %v189
  %263 = vmatpush1.bf16.msra.mxu0 %v188
  %264 = vmatprep.subr.bf16.mxu0 %v191
  %265 = vmatpush1.bf16.msra.mxu0 %v190
  %266 = vmatprep.subr.bf16.mxu0 %v193
  %267 = vmatpush1.bf16.msra.mxu0 %v192
  %268 = vmatprep.subr.bf16.mxu0 %v195
  %269 = vmatpush1.bf16.msra.mxu0 %v194
  %270 = vmatprep.subr.bf16.mxu0 %v242
  %271 = vmatpush1.bf16.msra.mxu0 %v239
  %272 = vmatprep.subr.bf16.mxu0 0
  %273 = vmatpush1.bf16.msra.mxu0 0
  %274 = vmatprep.subr.bf16.mxu0 0
  %275 = vmatpush1.bf16.msra.mxu0 0
  %276 = vmatprep.mubr.bf16.mxu0 %v226
  %277 = vmatmul.mubr.bf16.gmra.mrb[0].mxu0 %v77
  %v278 = vpop.f32.mrb[0].mxu0
  %v279 = vadd.f32 0.0, %v278
  %v280 = vpop.f32.mrb[0].mxu0
  %v281 = vadd.f32 0.0, %v280
  %v282 = vpop.f32.mrb[0].mxu0
  %v283 = vadd.f32 0.0, %v282
  %v284 = vpop.f32.mrb[0].mxu0
  %v285 = vadd.f32 0.0, %v284
  %286 = vmatprep.mubr.bf16.mxu0 %v229
  %287 = vmatmul.mubr.bf16.gmra.mrb[0].mxu0 %v79
  %v288 = vpop.f32.mrb[0].mxu0
  %v289 = vadd.f32 0.0, %v288
  %v290 = vpop.f32.mrb[0].mxu0
  %v291 = vadd.f32 0.0, %v290
  %v292 = vpop.f32.mrb[0].mxu0
  %v293 = vadd.f32 0.0, %v292
  %v294 = vpop.f32.mrb[0].mxu0
  %v295 = vadd.f32 0.0, %v294
  %296 = vmatprep.mubr.bf16.mxu0 %v232
  %297 = vmatmul.mubr.bf16.gmra.mrb[0].mxu0 %v81
  %v298 = vpop.f32.mrb[0].mxu0
  %v299 = vadd.f32 0.0, %v298
  %v300 = vpop.f32.mrb[0].mxu0
  %v301 = vadd.f32 0.0, %v300
  %v302 = vpop.f32.mrb[0].mxu0
  %v303 = vadd.f32 0.0, %v302
  %v304 = vpop.f32.mrb[0].mxu0
  %v305 = vadd.f32 0.0, %v304
  %306 = vmatprep.mubr.bf16.mxu0 %v235
  %307 = vmatmul.mubr.bf16.gmra.mrb[0].mxu0 %v83
  %v308 = vpop.f32.mrb[0].mxu0
  %v309 = vadd.f32 0.0, %v308
  %v310 = vpop.f32.mrb[0].mxu0
  %v311 = vadd.f32 0.0, %v310
  %v312 = vpop.f32.mrb[0].mxu0
  %v313 = vadd.f32 0.0, %v312
  %v314 = vpop.f32.mrb[0].mxu0
  %v315 = vadd.f32 0.0, %v314
  %316 = vdwg.mxu0
  %v317 = vmul.f32 %v279, %v279
  %v318 = vmul.f32 %v283, %v283
  %v319 = vmul.f32 %v289, %v289
  %v320 = vmul.f32 %v293, %v293
  %v321 = vmul.f32 %v299, %v299
  %v322 = vmul.f32 %v303, %v303
  %v323 = vmul.f32 %v309, %v309
  %v324 = vmul.f32 %v313, %v313
  %v325 = vmul.f32 %v281, %v281
  %v326 = vmul.f32 %v285, %v285
  %v327 = vmul.f32 %v291, %v291
  %v328 = vmul.f32 %v295, %v295
  %v329 = vmul.f32 %v301, %v301
  %v330 = vmul.f32 %v305, %v305
  %v331 = vmul.f32 %v311, %v311
  %v332 = vmul.f32 %v315, %v315
  %v333 = vadd.f32 %v317, %v325
  %v334 = vadd.f32 %v318, %v326
  %v335 = vadd.f32 %v319, %v327
  %v336 = vadd.f32 %v320, %v328
  %v337 = vadd.f32 %v321, %v329
  %v338 = vadd.f32 %v322, %v330
  %v339 = vadd.f32 %v323, %v331
  %v340 = vadd.f32 %v324, %v332
  %v341 = vld [vmem:[%s2] sm:$0xff]
  %v342 = vld [vmem:[%s2 + $0x8] sm:$0xff]
  %v343 = vld [vmem:[%s2 + $0x10] sm:$0xff]
  %v344 = vld [vmem:[%s2 + $0x18] sm:$0xff]
  %v345 = vld [vmem:[%s2 + $0x20] sm:$0xff]
  %v346 = vld [vmem:[%s2 + $0x28] sm:$0xff]
  %v347 = vld [vmem:[%s2 + $0x30] sm:$0xff]
  %v348 = vld [vmem:[%s2 + $0x38] sm:$0xff]
  %v349 = vld [vmem:[%s2 + $0x40] sm:$0xff]
  %v350 = vld [vmem:[%s2 + $0x48] sm:$0xff]
  %v351 = vld [vmem:[%s2 + $0x50] sm:$0xff]
  %v352 = vld [vmem:[%s2 + $0x58] sm:$0xff]
  %v353 = vld [vmem:[%s2 + $0x60] sm:$0xff]
  %v354 = vld [vmem:[%s2 + $0x68] sm:$0xff]
  %v355 = vld [vmem:[%s2 + $0x70] sm:$0xff]
  %v356 = vld [vmem:[%s2 + $0x78] sm:$0xff]
  %357 = vmatprep.subr.mxu0 0.0
  %358 = vmatpush1.msra.mxu0 %v341
  %359 = vmatprep.subr.mxu0 0.0
  %360 = vmatpush1.msra.mxu0 %v342
  %361 = vmatprep.subr.mxu0 0.0
  %362 = vmatpush1.msra.mxu0 %v343
  %363 = vmatprep.subr.mxu0 0.0
  %364 = vmatpush1.msra.mxu0 %v344
  %365 = vmatprep.subr.mxu0 0.0
  %366 = vmatpush1.msra.mxu0 %v345
  %367 = vmatprep.subr.mxu0 0.0
  %368 = vmatpush1.msra.mxu0 %v346
  %369 = vmatprep.subr.mxu0 0.0
  %370 = vmatpush1.msra.mxu0 %v347
  %371 = vmatprep.subr.mxu0 0.0
  %372 = vmatpush1.msra.mxu0 %v348
  %373 = vmatprep.subr.mxu0 0.0
  %374 = vmatpush1.msra.mxu0 %v349
  %375 = vmatprep.subr.mxu0 0.0
  %376 = vmatpush1.msra.mxu0 %v350
  %377 = vmatprep.subr.mxu0 0.0
  %378 = vmatpush1.msra.mxu0 %v351
  %379 = vmatprep.subr.mxu0 0.0
  %380 = vmatpush1.msra.mxu0 %v352
  %381 = vmatprep.subr.mxu0 0.0
  %382 = vmatpush1.msra.mxu0 %v353
  %383 = vmatprep.subr.mxu0 0.0
  %384 = vmatpush1.msra.mxu0 %v354
  %385 = vmatprep.subr.mxu0 0.0
  %386 = vmatpush1.msra.mxu0 %v355
  %387 = vmatprep.subr.mxu0 0.0
  %388 = vmatpush1.msra.mxu0 %v356
  %389 = vmatprep.subr.mxu0 0.0
  %390 = vmatpush1.msra.mxu0 0.0
  %391 = vmatprep.subr.mxu0 0.0
  %392 = vmatpush1.msra.mxu0 0.0
  %393 = vmatprep.subr.mxu0 0.0
  %394 = vmatpush1.msra.mxu0 0.0
  %395 = vmatprep.subr.mxu0 0.0
  %396 = vmatpush1.msra.mxu0 0.0
  %397 = vmatprep.subr.mxu0 0.0
  %398 = vmatpush1.msra.mxu0 0.0
  %399 = vmatprep.subr.mxu0 0.0
  %400 = vmatpush1.msra.mxu0 0.0
  %401 = vmatprep.subr.mxu0 0.0
  %402 = vmatpush1.msra.mxu0 0.0
  %403 = vmatprep.subr.mxu0 0.0
  %404 = vmatpush1.msra.mxu0 0.0
  %405 = vmatprep.subr.mxu0 0.0
  %406 = vmatpush1.msra.mxu0 0.0
  %407 = vmatprep.subr.mxu0 0.0
  %408 = vmatpush1.msra.mxu0 0.0
  %409 = vmatprep.subr.mxu0 0.0
  %410 = vmatpush1.msra.mxu0 0.0
  %411 = vmatprep.subr.mxu0 0.0
  %412 = vmatpush1.msra.mxu0 0.0
  %413 = vmatprep.subr.mxu0 0.0
  %414 = vmatpush1.msra.mxu0 0.0
  %415 = vmatprep.subr.mxu0 0.0
  %416 = vmatpush1.msra.mxu0 0.0
  %417 = vmatprep.subr.mxu0 0.0
  %418 = vmatpush1.msra.mxu0 0.0
  %419 = vmatprep.subr.mxu0 0.0
  %420 = vmatpush1.msra.mxu0 0.0
  %421 = vmatprep.mubr.f32.mxu0 0.0
  %422 = vmatmul.mubr.f32.gmra.mrb[0].mxu0 %v333
  %v423 = vpop.f32.mrb[0].mxu0
  %v424 = vadd.f32 1e-06, %v423
  %v425 = vpop.f32.mrb[0].mxu0
  %426 = vmatprep.mubr.f32.mxu0 0.0
  %427 = vmatmul.mubr.f32.gmra.mrb[0].mxu0 %v334
  %v428 = vpop.f32.mrb[0].mxu0
  %v429 = vadd.f32 1e-06, %v428
  %v430 = vpop.f32.mrb[0].mxu0
  %431 = vmatprep.mubr.f32.mxu0 0.0
  %432 = vmatmul.mubr.f32.gmra.mrb[0].mxu0 %v335
  %v433 = vpop.f32.mrb[0].mxu0
  %v434 = vadd.f32 1e-06, %v433
  %v435 = vpop.f32.mrb[0].mxu0
  %436 = vmatprep.mubr.f32.mxu0 0.0
  %437 = vmatmul.mubr.f32.gmra.mrb[0].mxu0 %v336
  %v438 = vpop.f32.mrb[0].mxu0
  %v439 = vadd.f32 1e-06, %v438
  %v440 = vpop.f32.mrb[0].mxu0
  %441 = vmatprep.mubr.f32.mxu0 0.0
  %442 = vmatmul.mubr.f32.gmra.mrb[0].mxu0 %v337
  %v443 = vpop.f32.mrb[0].mxu0
  %v444 = vadd.f32 1e-06, %v443
  %v445 = vpop.f32.mrb[0].mxu0
  %446 = vmatprep.mubr.f32.mxu0 0.0
  %447 = vmatmul.mubr.f32.gmra.mrb[0].mxu0 %v338
  %v448 = vpop.f32.mrb[0].mxu0
  %v449 = vadd.f32 1e-06, %v448
  %v450 = vpop.f32.mrb[0].mxu0
  %451 = vmatprep.mubr.f32.mxu0 0.0
  %452 = vmatmul.mubr.f32.gmra.mrb[0].mxu0 %v339
  %v453 = vpop.f32.mrb[0].mxu0
  %v454 = vadd.f32 1e-06, %v453
  %v455 = vpop.f32.mrb[0].mxu0
  %456 = vmatprep.mubr.f32.mxu0 0.0
  %457 = vmatmul.mubr.f32.gmra.mrb[0].mxu0 %v340
  %v458 = vpop.f32.mrb[0].mxu0
  %v459 = vadd.f32 1e-06, %v458
  %v460 = vpop.f32.mrb[0].mxu0
  %461 = vdwg.mxu0
  %v462 = vlog2.pop %v424
  %v463 = vmul.f32 %v462, 0.6931472
  %v464 = vlog2.pop %v429
  %v465 = vmul.f32 %v464, 0.6931472
  %v466 = vlog2.pop %v434
  %v467 = vmul.f32 %v466, 0.6931472
  %v468 = vlog2.pop %v439
  %v469 = vmul.f32 %v468, 0.6931472
  %v470 = vlog2.pop %v444
  %v471 = vmul.f32 %v470, 0.6931472
  %v472 = vlog2.pop %v449
  %v473 = vmul.f32 %v472, 0.6931472
  %v474 = vlog2.pop %v454
  %v475 = vmul.f32 %v474, 0.6931472
  %v476 = vlog2.pop %v459
  %v477 = vmul.f32 %v476, 0.6931472
  %v478 = vld [vmem:[%s3] sm:$0xff]
  %v479 = vld [vmem:[%s3 + $0x8] sm:$0xff]
  %v480 = vld [vmem:[%s3 + $0x10] sm:$0xff]
  %v481 = vld [vmem:[%s3 + $0x18] sm:$0xff]
  %v482 = vld [vmem:[%s3 + $0x20] sm:$0xff]
  %v483 = vld [vmem:[%s3 + $0x28] sm:$0xff]
  %v484 = vld [vmem:[%s3 + $0x30] sm:$0xff]
  %v485 = vld [vmem:[%s3 + $0x38] sm:$0xff]
  %v486 = vld [vmem:[%s3 + $0x40] sm:$0xff]
  %v487 = vld [vmem:[%s3 + $0x48] sm:$0xff]
  %v488 = vld [vmem:[%s3 + $0x50] sm:$0xff]
  %v489 = vld [vmem:[%s3 + $0x58] sm:$0xff]
  %v490 = vld [vmem:[%s3 + $0x60] sm:$0xff]
  %v491 = vld [vmem:[%s3 + $0x68] sm:$0xff]
  %v492 = vld [vmem:[%s3 + $0x70] sm:$0xff]
  %v493 = vld [vmem:[%s3 + $0x78] sm:$0xff]
  %494 = vmatprep.subr.mxu0 0.0
  %495 = vmatpush1.msra.mxu0 %v478
  %496 = vmatprep.subr.mxu0 0.0
  %497 = vmatpush1.msra.mxu0 %v479
  %498 = vmatprep.subr.mxu0 0.0
  %499 = vmatpush1.msra.mxu0 %v480
  %500 = vmatprep.subr.mxu0 0.0
  %501 = vmatpush1.msra.mxu0 %v481
  %502 = vmatprep.subr.mxu0 0.0
  %503 = vmatpush1.msra.mxu0 %v482
  %504 = vmatprep.subr.mxu0 0.0
  %505 = vmatpush1.msra.mxu0 %v483
  %506 = vmatprep.subr.mxu0 0.0
  %507 = vmatpush1.msra.mxu0 %v484
  %508 = vmatprep.subr.mxu0 0.0
  %509 = vmatpush1.msra.mxu0 %v485
  %510 = vmatprep.subr.mxu0 0.0
  %511 = vmatpush1.msra.mxu0 %v486
  %512 = vmatprep.subr.mxu0 0.0
  %513 = vmatpush1.msra.mxu0 %v487
  %514 = vmatprep.subr.mxu0 0.0
  %515 = vmatpush1.msra.mxu0 %v488
  %516 = vmatprep.subr.mxu0 0.0
  %517 = vmatpush1.msra.mxu0 %v489
  %518 = vmatprep.subr.mxu0 0.0
  %519 = vmatpush1.msra.mxu0 %v490
  %520 = vmatprep.subr.mxu0 0.0
  %521 = vmatpush1.msra.mxu0 %v491
  %522 = vmatprep.subr.mxu0 0.0
  %523 = vmatpush1.msra.mxu0 %v492
  %524 = vmatprep.subr.mxu0 0.0
  %525 = vmatpush1.msra.mxu0 %v493
  %526 = vmatprep.subr.mxu0 0.0
  %527 = vmatpush1.msra.mxu0 0.0
  %528 = vmatprep.subr.mxu0 0.0
  %529 = vmatpush1.msra.mxu0 0.0
  %530 = vmatprep.subr.mxu0 0.0
  %531 = vmatpush1.msra.mxu0 0.0
  %532 = vmatprep.subr.mxu0 0.0
  %533 = vmatpush1.msra.mxu0 0.0
  %534 = vmatprep.subr.mxu0 0.0
  %535 = vmatpush1.msra.mxu0 0.0
  %536 = vmatprep.subr.mxu0 0.0
  %537 = vmatpush1.msra.mxu0 0.0
  %538 = vmatprep.subr.mxu0 0.0
  %539 = vmatpush1.msra.mxu0 0.0
  %540 = vmatprep.subr.mxu0 0.0
  %541 = vmatpush1.msra.mxu0 0.0
  %542 = vmatprep.subr.mxu0 0.0
  %543 = vmatpush1.msra.mxu0 0.0
  %544 = vmatprep.subr.mxu0 0.0
  %545 = vmatpush1.msra.mxu0 0.0
  %546 = vmatprep.subr.mxu0 0.0
  %547 = vmatpush1.msra.mxu0 0.0
  %548 = vmatprep.subr.mxu0 0.0
  %549 = vmatpush1.msra.mxu0 0.0
  %550 = vmatprep.subr.mxu0 0.0
  %551 = vmatpush1.msra.mxu0 0.0
  %552 = vmatprep.subr.mxu0 0.0
  %553 = vmatpush1.msra.mxu0 0.0
  %554 = vmatprep.subr.mxu0 0.0
  %555 = vmatpush1.msra.mxu0 0.0
  %556 = vmatprep.subr.mxu0 0.0
  %557 = vmatpush1.msra.mxu0 0.0
  %558 = vmatprep.mubr.f32.mxu0 0.0
  %559 = vmatmul.mubr.f32.gmra.mrb[0].mxu0 %v463
  %v560 = vpop.f32.mrb[0].mxu0
  %v561 = vadd.f32 0.0, %v560
  %v562 = vpop.f32.mrb[0].mxu0
  %563 = vmatprep.mubr.f32.mxu0 0.0
  %564 = vmatmul.mubr.f32.gmra.mrb[0].mxu0 %v465
  %v565 = vpop.f32.mrb[0].mxu0
  %v566 = vadd.f32 0.0, %v565
  %v567 = vpop.f32.mrb[0].mxu0
  %568 = vmatprep.mubr.f32.mxu0 0.0
  %569 = vmatmul.mubr.f32.gmra.mrb[0].mxu0 %v467
  %v570 = vpop.f32.mrb[0].mxu0
  %v571 = vadd.f32 0.0, %v570
  %v572 = vpop.f32.mrb[0].mxu0
  %573 = vmatprep.mubr.f32.mxu0 0.0
  %574 = vmatmul.mubr.f32.gmra.mrb[0].mxu0 %v469
  %v575 = vpop.f32.mrb[0].mxu0
  %v576 = vadd.f32 0.0, %v575
  %v577 = vpop.f32.mrb[0].mxu0
  %578 = vmatprep.mubr.f32.mxu0 0.0
  %579 = vmatmul.mubr.f32.gmra.mrb[0].mxu0 %v471
  %v580 = vpop.f32.mrb[0].mxu0
  %v581 = vadd.f32 0.0, %v580
  %v582 = vpop.f32.mrb[0].mxu0
  %583 = vmatprep.mubr.f32.mxu0 0.0
  %584 = vmatmul.mubr.f32.gmra.mrb[0].mxu0 %v473
  %v585 = vpop.f32.mrb[0].mxu0
  %v586 = vadd.f32 0.0, %v585
  %v587 = vpop.f32.mrb[0].mxu0
  %588 = vmatprep.mubr.f32.mxu0 0.0
  %589 = vmatmul.mubr.f32.gmra.mrb[0].mxu0 %v475
  %v590 = vpop.f32.mrb[0].mxu0
  %v591 = vadd.f32 0.0, %v590
  %v592 = vpop.f32.mrb[0].mxu0
  %593 = vmatprep.mubr.f32.mxu0 0.0
  %594 = vmatmul.mubr.f32.gmra.mrb[0].mxu0 %v477
  %v595 = vpop.f32.mrb[0].mxu0
  %v596 = vadd.f32 0.0, %v595
  %v597 = vpop.f32.mrb[0].mxu0
  %598 = vdwg.mxu0
  %599 = vst [vmem:[%s4] sm:$0xff] %v561
  %600 = vst [vmem:[%s4 + $0x8] sm:$0xff] %v566
  %601 = vst [vmem:[%s4 + $0x10] sm:$0xff] %v571
  %602 = vst [vmem:[%s4 + $0x18] sm:$0xff] %v576
  %603 = vst [vmem:[%s4 + $0x20] sm:$0xff] %v581
  %604 = vst [vmem:[%s4 + $0x28] sm:$0xff] %v586
  %605 = vst [vmem:[%s4 + $0x30] sm:$0xff] %v591
  %606 = vst [vmem:[%s4 + $0x38] sm:$0xff] %v596
  // Predicated region
  $region18: #{_forward_jit.1} parent=0 // pred_check
    _
  $region19: #{_forward_jit.1} parent=0 // pred_check_branch
    %608 = sbr.rel (0) target = $region21
  $region20: #{_forward_jit.1} parent=0 // pred_region
    _
  $region21: #{_forward_jit.1} parent=0 // pred_fallthru
    _
  // Predicated region
  $region22: #{_forward_jit.1} parent=0 // pred_check
    _
  $region23: #{_forward_jit.1} parent=0 // pred_check_branch
    %610 = sbr.rel (0) target = $region25
  $region24: #{_forward_jit.1} parent=0 // pred_region
    _
  $region25: #{_forward_jit.1} parent=0 // pred_fallthru
    _

</llo_original>
